<compile_context>
chip_gen: v7x
topology: tpu7x:2x2x1
jax: 0.10.0
libtpu: 0.0.40
codegen_flags: <defaults>
</compile_context>

<pallas_src>
import functools

import jax
import jax.numpy as jnp
from jax.experimental import pallas as pl
from jax.experimental.pallas import tpu as pltpu


def _round_up(x: int, m: int) -> int:
    return ((x + m - 1) // m) * m


def _vmem_capacity_bytes() -> int:
    """Per-core VMEM capacity; conservative 64 MiB (v7x) if the query fails."""
    try:
        cap = getattr(pltpu.get_tpu_info(), "vmem_capacity_bytes", None)
        if cap:
            return int(cap)
    except Exception:
        pass
    return 64 * 1024 * 1024


def _one_hot(ids, v_off, tile_v, dtype):
    # Apply the chunk offset to the tiny (tile_n, 1) ids vector, not to the
    # (tile_n, tile_v) iota (one VALU pass over ~16 vregs instead of ~100s).
    rel = ids - v_off
    col = jax.lax.broadcasted_iota(jnp.int32, (ids.shape[0], tile_v), 1)
    return (col == rel).astype(dtype)


def _gather_resident_kernel(ids_ref, table_ref, out_ref):
    """Fast path: whole table resident in VMEM, one dot per output tile."""
    onehot = _one_hot(ids_ref[...], 0, table_ref.shape[0], table_ref.dtype)
    out_ref[...] = jnp.dot(
        onehot, table_ref[...], preferred_element_type=jnp.float32
    ).astype(out_ref.dtype)


def _gather_chunked_kernel(ids_ref, table_ref, out_ref, acc_ref):
    """Fallback: V-chunked reduction; reduction (V) axis is last in the grid."""
    vj = pl.program_id(1)
    tile_v = table_ref.shape[0]
    onehot = _one_hot(ids_ref[...], vj * tile_v, tile_v, table_ref.dtype)
    part = jnp.dot(onehot, table_ref[...], preferred_element_type=jnp.float32)

    @pl.when(vj == 0)
    def _():
        acc_ref[...] = part          # assign on first chunk (no zero-init pass)

    @pl.when(vj > 0)
    def _():
        acc_ref[...] += part

    @pl.when(vj == pl.num_programs(1) - 1)
    def _():
        out_ref[...] = acc_ref[...].astype(out_ref.dtype)


@functools.partial(jax.jit, static_argnames=("tile_n",))
def embedding_gather(ids_padded, table_padded, *, tile_n=128):
    """out[n, :] = table_padded[ids_padded[n, 0], :]  (padded shapes in / out).

    ids_padded:   (n_pad, 1) int32, n_pad a multiple of tile_n.
    table_padded: (v_pad, d_pad), v_pad and d_pad multiples of 128.
    Returns (n_pad, d_pad) in table_padded.dtype.
    """
    n_pad = ids_padded.shape[0]
    v_pad, d_pad = table_padded.shape
    itemsize = table_padded.dtype.itemsize
    n_tiles = n_pad // tile_n

    vmem_cap = _vmem_capacity_bytes()
    budget = int(vmem_cap * 0.6)                  # headroom for compiler scratch

    out_bytes = 2 * tile_n * d_pad * itemsize     # output tile, double-buffered
    ids_bytes = 2 * tile_n * 128 * 4              # ids tile (lane-padded), x2
    table_bytes = v_pad * d_pad * itemsize

    resident = (2 * table_bytes + out_bytes + ids_bytes) <= budget

    if resident:
        working = 2 * table_bytes + out_bytes + ids_bytes
        vmem_limit = min(max(int(working * 1.5), 8 * 1024 * 1024),
                         int(vmem_cap * 0.9))
        return pl.pallas_call(
            _gather_resident_kernel,
            out_shape=jax.ShapeDtypeStruct((n_pad, d_pad), table_padded.dtype),
            grid=(n_tiles,),
            in_specs=[
                pl.BlockSpec((tile_n, 1), lambda i: (i, 0)),
                # Constant block index -> the table is DMA'd into VMEM exactly once.
                pl.BlockSpec((v_pad, d_pad), lambda i: (0, 0)),
            ],
            out_specs=pl.BlockSpec((tile_n, d_pad), lambda i: (i, 0)),
            compiler_params=pltpu.CompilerParams(
                dimension_semantics=("parallel",),
                vmem_limit_bytes=vmem_limit,
            ),
        )(ids_padded, table_padded)

    # ---- fallback: table does not fit VMEM -> chunk the V (reduction) axis.
    acc_bytes = tile_n * d_pad * 4
    avail = max(budget - out_bytes - ids_bytes - acc_bytes,
                2 * 128 * d_pad * itemsize)
    n128 = v_pad // 128
    max_k = min(n128, max(1, avail // (2 * 128 * d_pad * itemsize)), 32)
    tile_v = 128
    for k in range(int(max_k), 0, -1):   # largest 128-multiple divisor of v_pad
        if n128 % k == 0:
            tile_v = k * 128
            break
    v_tiles = v_pad // tile_v

    working = 2 * tile_v * d_pad * itemsize + out_bytes + ids_bytes + acc_bytes
    vmem_limit = min(max(int(working * 1.5), 8 * 1024 * 1024),
                     int(vmem_cap * 0.9))

    # NOTE: with N-major / V-minor ordering the table is still streamed once per
    # N tile; larger tile_n reduces that proportionally.
    # TODO(synk): tile D as well for very large emb_dim (huge d_pad tiles).
    return pl.pallas_call(
        _gather_chunked_kernel,
        out_shape=jax.ShapeDtypeStruct((n_pad, d_pad), table_padded.dtype),
        grid=(n_tiles, v_tiles),
        in_specs=[
            pl.BlockSpec((tile_n, 1), lambda i, j: (i, 0)),
            pl.BlockSpec((tile_v, d_pad), lambda i, j: (j, 0)),
        ],
        out_specs=pl.BlockSpec((tile_n, d_pad), lambda i, j: (i, 0)),
        scratch_shapes=[pltpu.VMEM((tile_n, d_pad), jnp.float32)],
        compiler_params=pltpu.CompilerParams(
            dimension_semantics=("parallel", "arbitrary"),
            vmem_limit_bytes=vmem_limit,
        ),
    )(ids_padded, table_padded)


def _pick_tile_n(n: int) -> int:
    # 256 fills the 256-wide MXU on v6e/v7x and halves grid steps for large
    # queries; 128 keeps padding small and gives >=2 "parallel" tiles (both
    # v7x TensorCores busy) for medium-sized queries.
    return 256 if n > 256 else 128


class GConstantsJAX:
    """JAX/Pallas port of LTN GConstants: symbol -> embedding-row lookup."""

    def __init__(self, constants, emb_dim, key):
        self.symbol2id = {s: i for i, s in enumerate(constants)}
        self.id2symbol = {i: s for i, s in enumerate(constants)}
        self.emb_dim = emb_dim
        num = len(self.symbol2id)
        # nn.Embedding-equivalent weight (deterministic synthetic init).
        self.weight = jax.random.normal(key, (num, emb_dim), dtype=jnp.float32)
        # Call-invariant padding hoisted here (done once, not per forward).
        v_pad = _round_up(max(num, 1), 128)
        d_pad = _round_up(emb_dim, 128)
        self.weight_padded = jnp.pad(
            self.weight, ((0, v_pad - num), (0, d_pad - emb_dim)))

    def __call__(self, constants):
        n = len(constants)
        if n == 0:                                        # guard empty query
            return jnp.zeros((0, self.emb_dim), self.weight.dtype)
        ids = [self.symbol2id[c] for c in constants]
        tile_n = _pick_tile_n(n)
        n_pad = _round_up(n, tile_n)                      # bucketed -> no per-length recompile
        ids_arr = jnp.asarray(ids + [0] * (n_pad - n),
                              dtype=jnp.int32).reshape(n_pad, 1)
        out = embedding_gather(ids_arr, self.weight_padded, tile_n=tile_n)
        return out[:n, : self.emb_dim]


if __name__ == "__main__":
    key = jax.random.PRNGKey(0)

    vocab = [f"const_{i}" for i in range(10)]   # 10 constants
    emb_dim = 32

    model = GConstantsJAX(vocab, emb_dim, key)

    # Query a batch of 8 symbols (with repeats, like the torch module allows).
    query = ["const_3", "const_0", "const_7", "const_3",
             "const_9", "const_1", "const_4", "const_0"]

    out = jax.block_until_ready(model(query))

    # Reference check against a plain JAX gather.
    ids_ref = jnp.asarray([model.symbol2id[c] for c in query], dtype=jnp.int32)
    ref = model.weight[ids_ref]
    assert out.shape == (len(query), emb_dim), out.shape
    assert jnp.allclose(out, ref, rtol=1e-5, atol=1e-6), \
        "Pallas gather mismatch vs reference"

    print("KERNEL_OK")
</pallas_src>

<mosaic_0001>
module attributes {stable_mosaic.version = 11 : i64} {
  func.func @_gather_resident_kernel(%arg0: i32, %arg1: memref<128x1xi32, #tpu.memory_space<vmem>>, %arg2: memref<128x128xf32, #tpu.memory_space<vmem>>, %arg3: memref<128x128xf32, #tpu.memory_space<vmem>>) attributes {dimension_semantics = [#tpu.dimension_semantics<parallel>], iteration_bounds = array<i64: 1>, scalar_prefetch = 0 : i64, scratch_operands = 0 : i64, tpu.core_type = #tpu.core_type<tc>, window_params = [{transform_indices = @transform_0, window_bounds = array<i64: 128, 1>}, {pipeline_mode = #tpu.pipeline_mode<synchronous>, transform_indices = @transform_1, window_bounds = array<i64: 128, 128>}, {transform_indices = @transform_2, window_bounds = array<i64: 128, 128>}]} {
    %c0 = arith.constant 0 : index
    %c0_0 = arith.constant 0 : index
    %0 = vector.load %arg1[%c0, %c0_0] : memref<128x1xi32, #tpu.memory_space<vmem>>, vector<128x1xi32>
    %c0_i32 = arith.constant 0 : i32
    %1 = vector.broadcast %c0_i32 : i32 to vector<128x1xi32>
    %2 = arith.subi %0, %1 : vector<128x1xi32>
    %3 = tpu.iota {dimensions = array<i32: 1>} : vector<128x128xi32>
    %4 = vector.broadcast %2 : vector<128x1xi32> to vector<128x128xi32>
    %5 = arith.cmpi eq, %3, %4 : vector<128x128xi32>
    %6 = arith.extui %5 : vector<128x128xi1> to vector<128x128xi32>
    %7 = arith.sitofp %6 : vector<128x128xi32> to vector<128x128xf32>
    %c0_1 = arith.constant 0 : index
    %c0_2 = arith.constant 0 : index
    %8 = vector.load %arg2[%c0_1, %c0_2] : memref<128x128xf32, #tpu.memory_space<vmem>>, vector<128x128xf32>
    %cst = arith.constant dense<0.000000e+00> : vector<128x128xf32>
    %9 = tpu.matmul %7, %8, %cst {dimension_numbers = #tpu.dot_dimension_numbers<[1], [0], [0], [1], [0, 0, 1, 1], [], []>} : vector<128x128xf32>, vector<128x128xf32>, vector<128x128xf32> -> vector<128x128xf32>
    %c0_3 = arith.constant 0 : index
    %c0_4 = arith.constant 0 : index
    %10 = vector.load %arg3[%c0_3, %c0_4] : memref<128x128xf32, #tpu.memory_space<vmem>>, vector<128x128xf32>
    tpu.vector_store %arg3[%c0_3, %c0_4], %9 {strides = array<i32>} : memref<128x128xf32, #tpu.memory_space<vmem>>, vector<128x128xf32>,
    return
  }
  func.func @transform_0(%arg0: i32) -> (i32, i32) {
    %c0_i32 = arith.constant 0 : i32
    %c0_i32_0 = arith.constant 0 : i32
    return %arg0, %c0_i32 : i32, i32
  }
  func.func @transform_1(%arg0: i32) -> (i32, i32) {
    %c0_i32 = arith.constant 0 : i32
    %c0_i32_0 = arith.constant 0 : i32
    %c0_i32_1 = arith.constant 0 : i32
    return %c0_i32, %c0_i32_0 : i32, i32
  }
  func.func @transform_2(%arg0: i32) -> (i32, i32) {
    %c0_i32 = arith.constant 0 : i32
    %c0_i32_0 = arith.constant 0 : i32
    return %arg0, %c0_i32 : i32, i32
  }
}

</mosaic_0001>

<llo_original>
// kernel: embedding_gather.1
$region0: #{embedding_gather.1}
  #allocation0 [shape = 'u32[]', space=smem, size = 0x4, offset = 0x4, fixed_abs, tag = 'smem constant byte address 0x4 - core index']
  #allocation1 [shape = 'u32[144,128]{1,0:T(1,128)}', space=vmem, size = 0x12000, scoped, tag = 'internal scratch']
  %s0 = inlined_call_operand.vmem [shape: s32[128,1], index: 0, kind: input, shape index: {}]
  %s1 = inlined_call_operand.vmem [shape: f32[128,128], index: 1, kind: input, shape index: {}]
  %s2 = inlined_call_operand.hbm [shape: f32[128,128], index: 2, kind: output, shape index: {}]
  %s3 = sld [smem:[#allocation0]]
  $region18: #{embedding_gather.1} parent=0
    _
  %s5 = ssub.s32 1, %s3
  %s6 = scalar_select 0, %s5, %s3
  $region1: #{embedding_gather.1} parent=0
    #allocation2 [shape = 'u8[65536]{0}', space=vmem, size = 0x10000, scoped, tag = 'output window, operand 0, single buffered']
    #allocation3 [shape = 's32[1]{0}', space=sflag, size = 0x4, scoped, tag = 'scoped memory for embedding_gather.1']
    %7 = vsyncpa [#allocation3], 0
    // Predicated region
    $region2: #{embedding_gather.1} parent=1 // pred_check
      _
    $region3: #{embedding_gather.1} parent=1 // pred_check_branch
      %9 = sbr.rel (0) target = $region5
    $region4: #{embedding_gather.1} parent=1 // pred_region
      _
    $region5: #{embedding_gather.1} parent=1 // pred_fallthru
      _
    // Predicated region
    $region6: #{embedding_gather.1} parent=1 // pred_check
      _
    $region7: #{embedding_gather.1} parent=1 // pred_check_branch
      %11 = sbr.rel (0) target = $region9
    $region8: #{embedding_gather.1} parent=1 // pred_region
      _
    $region9: #{embedding_gather.1} parent=1 // pred_fallthru
      _
    %v12 = vld [vmem:[%s0] sm:$0xff]
    %v13 = vld [vmem:[%s0 + $0x8] sm:$0xff]
    %v14 = vld [vmem:[%s0 + $0x10] sm:$0xff]
    %v15 = vld [vmem:[%s0 + $0x18] sm:$0xff]
    %v16 = vld [vmem:[%s0 + $0x20] sm:$0xff]
    %v17 = vld [vmem:[%s0 + $0x28] sm:$0xff]
    %v18 = vld [vmem:[%s0 + $0x30] sm:$0xff]
    %v19 = vld [vmem:[%s0 + $0x38] sm:$0xff]
    %v20 = vld [vmem:[%s0 + $0x40] sm:$0xff]
    %v21 = vld [vmem:[%s0 + $0x48] sm:$0xff]
    %v22 = vld [vmem:[%s0 + $0x50] sm:$0xff]
    %v23 = vld [vmem:[%s0 + $0x58] sm:$0xff]
    %v24 = vld [vmem:[%s0 + $0x60] sm:$0xff]
    %v25 = vld [vmem:[%s0 + $0x68] sm:$0xff]
    %v26 = vld [vmem:[%s0 + $0x70] sm:$0xff]
    %v27 = vld [vmem:[%s0 + $0x78] sm:$0xff]
    %v28 = vlaneseq
    %v29 = vand.u32 %v28, 127
    %30 = vset.pattern.permute.xlu0 0
    %31 = vperm.xlu0 %30, %v12
    %v32 = vpop.permute.xlu0 %31
    %33 = vset.pattern.permute.xlu0 0
    %34 = vperm.xlu0 %33, %v13
    %v35 = vpop.permute.xlu0 %34
    %36 = vset.pattern.permute.xlu0 0
    %37 = vperm.xlu0 %36, %v14
    %v38 = vpop.permute.xlu0 %37
    %39 = vset.pattern.permute.xlu0 0
    %40 = vperm.xlu0 %39, %v15
    %v41 = vpop.permute.xlu0 %40
    %42 = vset.pattern.permute.xlu0 0
    %43 = vperm.xlu0 %42, %v16
    %v44 = vpop.permute.xlu0 %43
    %45 = vset.pattern.permute.xlu0 0
    %46 = vperm.xlu0 %45, %v17
    %v47 = vpop.permute.xlu0 %46
    %48 = vset.pattern.permute.xlu0 0
    %49 = vperm.xlu0 %48, %v18
    %v50 = vpop.permute.xlu0 %49
    %51 = vset.pattern.permute.xlu0 0
    %52 = vperm.xlu0 %51, %v19
    %v53 = vpop.permute.xlu0 %52
    %54 = vset.pattern.permute.xlu0 0
    %55 = vperm.xlu0 %54, %v20
    %v56 = vpop.permute.xlu0 %55
    %57 = vset.pattern.permute.xlu0 0
    %58 = vperm.xlu0 %57, %v21
    %v59 = vpop.permute.xlu0 %58
    %60 = vset.pattern.permute.xlu0 0
    %61 = vperm.xlu0 %60, %v22
    %v62 = vpop.permute.xlu0 %61
    %63 = vset.pattern.permute.xlu0 0
    %64 = vperm.xlu0 %63, %v23
    %v65 = vpop.permute.xlu0 %64
    %66 = vset.pattern.permute.xlu0 0
    %67 = vperm.xlu0 %66, %v24
    %v68 = vpop.permute.xlu0 %67
    %69 = vset.pattern.permute.xlu0 0
    %70 = vperm.xlu0 %69, %v25
    %v71 = vpop.permute.xlu0 %70
    %72 = vset.pattern.permute.xlu0 0
    %73 = vperm.xlu0 %72, %v26
    %v74 = vpop.permute.xlu0 %73
    %75 = vset.pattern.permute.xlu0 0
    %76 = vperm.xlu0 %75, %v27
    %v77 = vpop.permute.xlu0 %76
    %vm78 = vcmp.eq.s32.totalorder %v29, %v32
    %vm79 = vcmp.eq.s32.totalorder %v29, %v35
    %vm80 = vcmp.eq.s32.totalorder %v29, %v38
    %vm81 = vcmp.eq.s32.totalorder %v29, %v41
    %vm82 = vcmp.eq.s32.totalorder %v29, %v44
    %vm83 = vcmp.eq.s32.totalorder %v29, %v47
    %vm84 = vcmp.eq.s32.totalorder %v29, %v50
    %vm85 = vcmp.eq.s32.totalorder %v29, %v53
    %vm86 = vcmp.eq.s32.totalorder %v29, %v56
    %vm87 = vcmp.eq.s32.totalorder %v29, %v59
    %vm88 = vcmp.eq.s32.totalorder %v29, %v62
    %vm89 = vcmp.eq.s32.totalorder %v29, %v65
    %vm90 = vcmp.eq.s32.totalorder %v29, %v68
    %vm91 = vcmp.eq.s32.totalorder %v29, %v71
    %vm92 = vcmp.eq.s32.totalorder %v29, %v74
    %vm93 = vcmp.eq.s32.totalorder %v29, %v77
    %v94 = vsel %vm78, 1, 0
    %v95 = vsel %vm79, 1, 0
    %v96 = vsel %vm80, 1, 0
    %v97 = vsel %vm81, 1, 0
    %v98 = vsel %vm82, 1, 0
    %v99 = vsel %vm83, 1, 0
    %v100 = vsel %vm84, 1, 0
    %v101 = vsel %vm85, 1, 0
    %v102 = vsel %vm86, 1, 0
    %v103 = vsel %vm87, 1, 0
    %v104 = vsel %vm88, 1, 0
    %v105 = vsel %vm89, 1, 0
    %v106 = vsel %vm90, 1, 0
    %v107 = vsel %vm91, 1, 0
    %v108 = vsel %vm92, 1, 0
    %v109 = vsel %vm93, 1, 0
    %v110 = vcvt.s32.f32 %v94
    %v111 = vcvt.s32.f32 %v95
    %v112 = vcvt.s32.f32 %v96
    %v113 = vcvt.s32.f32 %v97
    %v114 = vcvt.s32.f32 %v98
    %v115 = vcvt.s32.f32 %v99
    %v116 = vcvt.s32.f32 %v100
    %v117 = vcvt.s32.f32 %v101
    %v118 = vcvt.s32.f32 %v102
    %v119 = vcvt.s32.f32 %v103
    %v120 = vcvt.s32.f32 %v104
    %v121 = vcvt.s32.f32 %v105
    %v122 = vcvt.s32.f32 %v106
    %v123 = vcvt.s32.f32 %v107
    %v124 = vcvt.s32.f32 %v108
    %v125 = vcvt.s32.f32 %v109
    %v126 = vld [vmem:[%s1] sm:$0xff]
    %v127 = vld [vmem:[%s1 + $0x8] sm:$0xff]
    %v128 = vld [vmem:[%s1 + $0x10] sm:$0xff]
    %v129 = vld [vmem:[%s1 + $0x18] sm:$0xff]
    %v130 = vld [vmem:[%s1 + $0x20] sm:$0xff]
    %v131 = vld [vmem:[%s1 + $0x28] sm:$0xff]
    %v132 = vld [vmem:[%s1 + $0x30] sm:$0xff]
    %v133 = vld [vmem:[%s1 + $0x38] sm:$0xff]
    %v134 = vld [vmem:[%s1 + $0x40] sm:$0xff]
    %v135 = vld [vmem:[%s1 + $0x48] sm:$0xff]
    %v136 = vld [vmem:[%s1 + $0x50] sm:$0xff]
    %v137 = vld [vmem:[%s1 + $0x58] sm:$0xff]
    %v138 = vld [vmem:[%s1 + $0x60] sm:$0xff]
    %v139 = vld [vmem:[%s1 + $0x68] sm:$0xff]
    %v140 = vld [vmem:[%s1 + $0x70] sm:$0xff]
    %v141 = vld [vmem:[%s1 + $0x78] sm:$0xff]
    %142 = vmatprep.subr.mxu0 0.0
    %143 = vmatpush1.msra.mxu0 %v126
    %144 = vmatprep.subr.mxu0 0.0
    %145 = vmatpush1.msra.mxu0 %v127
    %146 = vmatprep.subr.mxu0 0.0
    %147 = vmatpush1.msra.mxu0 %v128
    %148 = vmatprep.subr.mxu0 0.0
    %149 = vmatpush1.msra.mxu0 %v129
    %150 = vmatprep.subr.mxu0 0.0
    %151 = vmatpush1.msra.mxu0 %v130
    %152 = vmatprep.subr.mxu0 0.0
    %153 = vmatpush1.msra.mxu0 %v131
    %154 = vmatprep.subr.mxu0 0.0
    %155 = vmatpush1.msra.mxu0 %v132
    %156 = vmatprep.subr.mxu0 0.0
    %157 = vmatpush1.msra.mxu0 %v133
    %158 = vmatprep.subr.mxu0 0.0
    %159 = vmatpush1.msra.mxu0 %v134
    %160 = vmatprep.subr.mxu0 0.0
    %161 = vmatpush1.msra.mxu0 %v135
    %162 = vmatprep.subr.mxu0 0.0
    %163 = vmatpush1.msra.mxu0 %v136
    %164 = vmatprep.subr.mxu0 0.0
    %165 = vmatpush1.msra.mxu0 %v137
    %166 = vmatprep.subr.mxu0 0.0
    %167 = vmatpush1.msra.mxu0 %v138
    %168 = vmatprep.subr.mxu0 0.0
    %169 = vmatpush1.msra.mxu0 %v139
    %170 = vmatprep.subr.mxu0 0.0
    %171 = vmatpush1.msra.mxu0 %v140
    %172 = vmatprep.subr.mxu0 0.0
    %173 = vmatpush1.msra.mxu0 %v141
    %174 = vmatprep.subr.mxu0 0.0
    %175 = vmatpush1.msra.mxu0 0.0
    %176 = vmatprep.subr.mxu0 0.0
    %177 = vmatpush1.msra.mxu0 0.0
    %178 = vmatprep.subr.mxu0 0.0
    %179 = vmatpush1.msra.mxu0 0.0
    %180 = vmatprep.subr.mxu0 0.0
    %181 = vmatpush1.msra.mxu0 0.0
    %182 = vmatprep.subr.mxu0 0.0
    %183 = vmatpush1.msra.mxu0 0.0
    %184 = vmatprep.subr.mxu0 0.0
    %185 = vmatpush1.msra.mxu0 0.0
    %186 = vmatprep.subr.mxu0 0.0
    %187 = vmatpush1.msra.mxu0 0.0
    %188 = vmatprep.subr.mxu0 0.0
    %189 = vmatpush1.msra.mxu0 0.0
    %190 = vmatprep.subr.mxu0 0.0
    %191 = vmatpush1.msra.mxu0 0.0
    %192 = vmatprep.subr.mxu0 0.0
    %193 = vmatpush1.msra.mxu0 0.0
    %194 = vmatprep.subr.mxu0 0.0
    %195 = vmatpush1.msra.mxu0 0.0
    %196 = vmatprep.subr.mxu0 0.0
    %197 = vmatpush1.msra.mxu0 0.0
    %198 = vmatprep.subr.mxu0 0.0
    %199 = vmatpush1.msra.mxu0 0.0
    %200 = vmatprep.subr.mxu0 0.0
    %201 = vmatpush1.msra.mxu0 0.0
    %202 = vmatprep.subr.mxu0 0.0
    %203 = vmatpush1.msra.mxu0 0.0
    %204 = vmatprep.subr.mxu0 0.0
    %205 = vmatpush1.msra.mxu0 0.0
    %206 = vmatprep.mubr.f32.mxu0 0.0
    %207 = vmatmul.mubr.f32.gmra.mrb[0].mxu0 %v110
    %v208 = vpop.f32.mrb[0].mxu0
    %v209 = vadd.f32 0.0, %v208
    %v210 = vpop.f32.mrb[0].mxu0
    %211 = vmatprep.mubr.f32.mxu0 0.0
    %212 = vmatmul.mubr.f32.gmra.mrb[0].mxu0 %v111
    %v213 = vpop.f32.mrb[0].mxu0
    %v214 = vadd.f32 0.0, %v213
    %v215 = vpop.f32.mrb[0].mxu0
    %216 = vmatprep.mubr.f32.mxu0 0.0
    %217 = vmatmul.mubr.f32.gmra.mrb[0].mxu0 %v112
    %v218 = vpop.f32.mrb[0].mxu0
    %v219 = vadd.f32 0.0, %v218
    %v220 = vpop.f32.mrb[0].mxu0
    %221 = vmatprep.mubr.f32.mxu0 0.0
    %222 = vmatmul.mubr.f32.gmra.mrb[0].mxu0 %v113
    %v223 = vpop.f32.mrb[0].mxu0
    %v224 = vadd.f32 0.0, %v223
    %v225 = vpop.f32.mrb[0].mxu0
    %226 = vmatprep.mubr.f32.mxu0 0.0
    %227 = vmatmul.mubr.f32.gmra.mrb[0].mxu0 %v114
    %v228 = vpop.f32.mrb[0].mxu0
    %v229 = vadd.f32 0.0, %v228
    %v230 = vpop.f32.mrb[0].mxu0
    %231 = vmatprep.mubr.f32.mxu0 0.0
    %232 = vmatmul.mubr.f32.gmra.mrb[0].mxu0 %v115
    %v233 = vpop.f32.mrb[0].mxu0
    %v234 = vadd.f32 0.0, %v233
    %v235 = vpop.f32.mrb[0].mxu0
    %236 = vmatprep.mubr.f32.mxu0 0.0
    %237 = vmatmul.mubr.f32.gmra.mrb[0].mxu0 %v116
    %v238 = vpop.f32.mrb[0].mxu0
    %v239 = vadd.f32 0.0, %v238
    %v240 = vpop.f32.mrb[0].mxu0
    %241 = vmatprep.mubr.f32.mxu0 0.0
    %242 = vmatmul.mubr.f32.gmra.mrb[0].mxu0 %v117
    %v243 = vpop.f32.mrb[0].mxu0
    %v244 = vadd.f32 0.0, %v243
    %v245 = vpop.f32.mrb[0].mxu0
    %246 = vmatprep.mubr.f32.mxu0 0.0
    %247 = vmatmul.mubr.f32.gmra.mrb[0].mxu0 %v118
    %v248 = vpop.f32.mrb[0].mxu0
    %v249 = vadd.f32 0.0, %v248
    %v250 = vpop.f32.mrb[0].mxu0
    %251 = vmatprep.mubr.f32.mxu0 0.0
    %252 = vmatmul.mubr.f32.gmra.mrb[0].mxu0 %v119
    %v253 = vpop.f32.mrb[0].mxu0
    %v254 = vadd.f32 0.0, %v253
    %v255 = vpop.f32.mrb[0].mxu0
    %256 = vmatprep.mubr.f32.mxu0 0.0
    %257 = vmatmul.mubr.f32.gmra.mrb[0].mxu0 %v120
    %v258 = vpop.f32.mrb[0].mxu0
    %v259 = vadd.f32 0.0, %v258
    %v260 = vpop.f32.mrb[0].mxu0
    %261 = vmatprep.mubr.f32.mxu0 0.0
    %262 = vmatmul.mubr.f32.gmra.mrb[0].mxu0 %v121
    %v263 = vpop.f32.mrb[0].mxu0
    %v264 = vadd.f32 0.0, %v263
    %v265 = vpop.f32.mrb[0].mxu0
    %266 = vmatprep.mubr.f32.mxu0 0.0
    %267 = vmatmul.mubr.f32.gmra.mrb[0].mxu0 %v122
    %v268 = vpop.f32.mrb[0].mxu0
    %v269 = vadd.f32 0.0, %v268
    %v270 = vpop.f32.mrb[0].mxu0
    %271 = vmatprep.mubr.f32.mxu0 0.0
    %272 = vmatmul.mubr.f32.gmra.mrb[0].mxu0 %v123
    %v273 = vpop.f32.mrb[0].mxu0
    %v274 = vadd.f32 0.0, %v273
    %v275 = vpop.f32.mrb[0].mxu0
    %276 = vmatprep.mubr.f32.mxu0 0.0
    %277 = vmatmul.mubr.f32.gmra.mrb[0].mxu0 %v124
    %v278 = vpop.f32.mrb[0].mxu0
    %v279 = vadd.f32 0.0, %v278
    %v280 = vpop.f32.mrb[0].mxu0
    %281 = vmatprep.mubr.f32.mxu0 0.0
    %282 = vmatmul.mubr.f32.gmra.mrb[0].mxu0 %v125
    %v283 = vpop.f32.mrb[0].mxu0
    %v284 = vadd.f32 0.0, %v283
    %v285 = vpop.f32.mrb[0].mxu0
    %286 = vdwg.mxu0
    %287 = vst [vmem:[#allocation2] sm:$0xff] %v209
    %288 = vst [vmem:[#allocation2 + $0x8] sm:$0xff] %v214
    %289 = vst [vmem:[#allocation2 + $0x10] sm:$0xff] %v219
    %290 = vst [vmem:[#allocation2 + $0x18] sm:$0xff] %v224
    %291 = vst [vmem:[#allocation2 + $0x20] sm:$0xff] %v229
    %292 = vst [vmem:[#allocation2 + $0x28] sm:$0xff] %v234
    %293 = vst [vmem:[#allocation2 + $0x30] sm:$0xff] %v239
    %294 = vst [vmem:[#allocation2 + $0x38] sm:$0xff] %v244
    %295 = vst [vmem:[#allocation2 + $0x40] sm:$0xff] %v249
    %296 = vst [vmem:[#allocation2 + $0x48] sm:$0xff] %v254
    %297 = vst [vmem:[#allocation2 + $0x50] sm:$0xff] %v259
    %298 = vst [vmem:[#allocation2 + $0x58] sm:$0xff] %v264
    %299 = vst [vmem:[#allocation2 + $0x60] sm:$0xff] %v269
    %300 = vst [vmem:[#allocation2 + $0x68] sm:$0xff] %v274
    %301 = vst [vmem:[#allocation2 + $0x70] sm:$0xff] %v279
    %302 = vst [vmem:[#allocation2 + $0x78] sm:$0xff] %v284
    // Predicated region
    $region10: #{embedding_gather.1} parent=1 // pred_check
      _
    $region11: #{embedding_gather.1} parent=1 // pred_check_branch
      %304 = sbr.rel (0) target = $region13
    $region12: #{embedding_gather.1} parent=1 // pred_region
      %s306 = ssub.s32 2048, 2048
      %307 = vsyncadd [#allocation3], %s306
      %s308 = sshll.u32 [#allocation2], 4
      %s309 = int_to_ptr.vmem [resolvable:$true] %s308
      %314 = dma.vmem_to_hbm [thread:$0]  %s309, 2048, %s2, [#allocation3], 128, 128, 8
    $region13: #{embedding_gather.1} parent=1 // pred_fallthru
      _
    // Predicated region
    $region14: #{embedding_gather.1} parent=1 // pred_check
      _
    $region15: #{embedding_gather.1} parent=1 // pred_check_branch
      %316 = sbr.rel (0) target = $region17
    $region16: #{embedding_gather.1} parent=1 // pred_region
      %317 = dma.done [#allocation3], 2048
    $region17: #{embedding_gather.1} parent=1 // pred_fallthru
      _
    %318 = vsyncpa [#allocation3], 1

</llo_original>
